<compile_context>
chip_gen: v7x
topology: tpu7x:2x2x1
jax: 0.10.0
libtpu: 0.0.40
codegen_flags: <defaults>
</compile_context>

<pallas_src>
import jax
import jax.numpy as jnp
from jax import lax
from jax.experimental import pallas as pl
from jax.experimental.pallas import tpu as pltpu

K_NEIGHBORS = 6          # k in the PyTorch module
_LABEL_ROW_OFFSET = 8    # label column starts at an 8-aligned sublane offset


def gcn_kernel(micro_ref, micro_all_ref, aux_ref, out_ref, loss_ref,
               lhs_ref, rhs_ref):
    N, C = micro_ref.shape
    M = micro_all_ref.shape[0]

    micro = micro_ref[...]                                # (N, C)
    micro_all = micro_all_ref[...]                        # (M, C)
    coef = aux_ref[0:1, 0:C] - jnp.float32(1.0 / C)       # (1, C): w - 1/C

    # ---- fused weighted-squared-distance matmul (one K=2C MXU pass) --------
    # anti[i,j] = sum_c coef_c*ma[j,c]^2 - 2*sum_c coef_c*mi[i,c]*ma[j,c]
    #           = [ -2*coef*mi_i | coef ] . [ ma_j | ma_j^2 ]
    # (per-row constant sum_c coef_c*mi[i,c]^2 dropped: softmax / top-k /
    #  renormalized cut are invariant to per-row shifts.)
    lhs_ref[:, 0:C] = jnp.float32(-2.0) * coef * micro
    lhs_ref[:, C:2 * C] = jnp.broadcast_to(coef, (N, C))
    rhs_ref[:, 0:C] = micro_all
    rhs_ref[:, C:2 * C] = micro_all * micro_all
    anti = lax.dot_general(
        lhs_ref[...], rhs_ref[...], (((1,), (1,)), ((), ())),
        precision=lax.Precision.HIGHEST,   # bf16 cancellation must not flip top-k
        preferred_element_type=jnp.float32)                # (N, M)

    # ---- top-k (k=6) on anti directly; reuse first row-max as softmax m ----
    # Exact float ties select every tied column (measure-zero for continuous
    # inputs; reference argsort tie handling is arbitrary as well).
    work = anti
    mask = None
    m = None
    for t in range(K_NEIGHBORS):
        mx = jnp.max(work, axis=1, keepdims=True)
        if t == 0:
            m = mx                                          # softmax stabilizer
        sel = work == mx
        mask = sel if mask is None else jnp.logical_or(mask, sel)
        if t + 1 < K_NEIGHBORS:                             # last update is dead work
            work = jnp.where(sel, -jnp.inf, work)

    # ---- unnormalized softmax numerator; full denominator cancels ----------
    e = jnp.exp(anti - m)                                   # overlaps top-k chain
    em = jnp.where(mask, e, jnp.float32(0.0))
    cut = em / jnp.sum(em, axis=1, keepdims=True)           # exact (N,1) divide

    # ---- aggregate neighbors (MXU): micro_tmp = micro + cut @ micro_all ----
    out_ref[...] = micro + jnp.dot(cut, micro_all,
                                   precision=lax.Precision.HIGHEST,
                                   preferred_element_type=jnp.float32)

    # ---- composition loss: 1e-4 + <|label_all - label_i|, cut> / N ---------
    label_all_row = aux_ref[1:2, 0:M]                                   # (1, M)
    label_col = aux_ref[_LABEL_ROW_OFFSET:_LABEL_ROW_OFFSET + N, 0:1]   # (N, 1)
    dis_label = jnp.abs(label_all_row - label_col)                      # (N, M)
    loss_ref[0, 0] = (jnp.float32(1e-4)
                      + jnp.sum(dis_label * cut) * jnp.float32(1.0 / N))


@jax.jit
def gcn_forward(micro, micro_all, w, label, label_all):
    micro = micro.astype(jnp.float32)
    micro_all = micro_all.astype(jnp.float32)
    N, C = micro.shape
    M = micro_all.shape[0]
    W = max(C, M)

    # Pack the three small vectors into one aux operand (3 input DMAs, not 5):
    #   row 0                : fc weight w                 (C lanes)
    #   row 1                : label_all                   (M lanes)
    #   rows 8 .. 8+N        : label, lane 0  -> read back as an (N,1) column
    aux = jnp.zeros((_LABEL_ROW_OFFSET + N, W), jnp.float32)
    aux = aux.at[0, :C].set(w.reshape(-1).astype(jnp.float32))
    aux = aux.at[1, :M].set(label_all.reshape(-1).astype(jnp.float32))
    aux = aux.at[_LABEL_ROW_OFFSET:_LABEL_ROW_OFFSET + N, 0].set(
        label.reshape(-1).astype(jnp.float32))

    flops = 2 * N * M * (2 * C) + 2 * N * M * C
    bytes_accessed = 4 * (N * C + M * C + aux.size + N * C + 1)

    micro_tmp, loss = pl.pallas_call(
        gcn_kernel,
        out_shape=(jax.ShapeDtypeStruct((N, C), jnp.float32),
                   jax.ShapeDtypeStruct((1, 1), jnp.float32)),
        in_specs=[pl.BlockSpec(memory_space=pltpu.MemorySpace.VMEM)] * 3,
        out_specs=(pl.BlockSpec(memory_space=pltpu.MemorySpace.VMEM),
                   pl.BlockSpec(memory_space=pltpu.MemorySpace.SMEM)),
        scratch_shapes=[pltpu.VMEM((N, 2 * C), jnp.float32),   # fused LHS
                        pltpu.VMEM((M, 2 * C), jnp.float32)],  # fused RHS
        cost_estimate=pl.CostEstimate(flops=flops,
                                      transcendentals=N * M,
                                      bytes_accessed=bytes_accessed),
    )(micro, micro_all, aux)
    return micro_tmp, loss[0, 0]


def ref_forward(micro, micro_all, w, label, label_all):
    """Plain-JAX reference mirroring the PyTorch forward (exact matmuls)."""
    with jax.default_matmul_precision("float32"):
        N = micro.shape[0]
        dis = (micro_all[None] - micro[:, None]) ** 2
        anti = dis @ w - dis.mean(-1)
        anti = jax.nn.softmax(anti, axis=1)
        idx = jnp.argsort(anti, axis=1)[:, -K_NEIGHBORS:]
        mask = jnp.zeros_like(anti).at[jnp.arange(N)[:, None], idx].set(1.0)
        cut = anti * mask
        cut = cut / cut.sum(1, keepdims=True)
        micro_tmp = micro + cut @ micro_all
        dis_label = jnp.abs(label_all[None] - label[:, None])
        loss = 1e-4 + jnp.dot(dis_label.reshape(-1), cut.reshape(-1)) / N
    return micro_tmp, loss


if __name__ == "__main__":
    N, M, C = 8, 16, 32
    key = jax.random.PRNGKey(0)
    k1, k2, k3, k4, k5 = jax.random.split(key, 5)
    micro = jax.random.normal(k1, (N, C), jnp.float32)
    micro_all = jax.random.normal(k2, (M, C), jnp.float32)
    label = jax.random.normal(k3, (N,), jnp.float32)
    label_all = jax.random.normal(k4, (M,), jnp.float32)
    # nn.Linear(C, 1, bias=False) weight, deterministic uniform init
    bound = 1.0 / jnp.sqrt(jnp.float32(C))
    w = jax.random.uniform(k5, (C,), jnp.float32, -bound, bound)

    micro_tmp, co_loss = gcn_forward(micro, micro_all, w, label, label_all)
    jax.block_until_ready((micro_tmp, co_loss))

    ref_out, ref_loss = ref_forward(micro, micro_all, w, label, label_all)
    # HIGHEST-precision dots in the kernel keep any mismatch far below a
    # wrong top-k selection / aggregation error (which would be O(0.1-1)).
    assert jnp.allclose(micro_tmp, ref_out, atol=5e-3, rtol=5e-3)
    assert jnp.allclose(co_loss, ref_loss, atol=5e-3, rtol=5e-3)

    print("KERNEL_OK")
</pallas_src>

<mosaic_0001>
module attributes {stable_mosaic.version = 11 : i64} {
  func.func @gcn_kernel(%arg0: memref<8x32xf32, #tpu.memory_space<vmem>>, %arg1: memref<16x32xf32, #tpu.memory_space<vmem>>, %arg2: memref<16x32xf32, #tpu.memory_space<vmem>>, %arg3: memref<8x32xf32, #tpu.memory_space<vmem>>, %arg4: memref<1x1xf32, #tpu.memory_space<smem>>, %arg5: memref<8x64xf32, #tpu.memory_space<vmem>>, %arg6: memref<16x64xf32, #tpu.memory_space<vmem>>) attributes {dimension_semantics = [], scalar_prefetch = 0 : i64, scratch_operands = 2 : i64, tpu.core_type = #tpu.core_type<tc>} {
    %c0 = arith.constant 0 : index
    %c0_0 = arith.constant 0 : index
    %0 = vector.load %arg0[%c0, %c0_0] : memref<8x32xf32, #tpu.memory_space<vmem>>, vector<8x32xf32>
    %c0_1 = arith.constant 0 : index
    %c0_2 = arith.constant 0 : index
    %1 = vector.load %arg1[%c0_1, %c0_2] : memref<16x32xf32, #tpu.memory_space<vmem>>, vector<16x32xf32>
    %c0_3 = arith.constant 0 : index
    %c0_4 = arith.constant 0 : index
    %2 = vector.load %arg2[%c0_3, %c0_4] : memref<16x32xf32, #tpu.memory_space<vmem>>, vector<1x32xf32>
    %cst = arith.constant 3.125000e-02 : f32
    %3 = vector.broadcast %cst : f32 to vector<1x32xf32>
    %4 = arith.subf %2, %3 : vector<1x32xf32>
    %cst_5 = arith.constant -2.000000e+00 : f32
    %5 = vector.broadcast %cst_5 : f32 to vector<1x32xf32>
    %6 = arith.mulf %5, %4 : vector<1x32xf32>
    %7 = vector.broadcast %6 : vector<1x32xf32> to vector<8x32xf32>
    %8 = arith.mulf %7, %0 : vector<8x32xf32>
    %c0_6 = arith.constant 0 : index
    %c0_7 = arith.constant 0 : index
    %9 = vector.load %arg5[%c0_6, %c0_7] : memref<8x64xf32, #tpu.memory_space<vmem>>, vector<8x32xf32>
    tpu.vector_store %arg5[%c0_6, %c0_7], %8 {strides = array<i32>} : memref<8x64xf32, #tpu.memory_space<vmem>>, vector<8x32xf32>,
    %10 = vector.shape_cast %4 : vector<1x32xf32> to vector<1x32xf32>
    %11 = vector.broadcast %10 : vector<1x32xf32> to vector<8x32xf32>
    %c0_8 = arith.constant 0 : index
    %c32 = arith.constant 32 : index
    %12 = vector.load %arg5[%c0_8, %c32] : memref<8x64xf32, #tpu.memory_space<vmem>>, vector<8x32xf32>
    tpu.vector_store %arg5[%c0_8, %c32], %11 {strides = array<i32>} : memref<8x64xf32, #tpu.memory_space<vmem>>, vector<8x32xf32>,
    %c0_9 = arith.constant 0 : index
    %c0_10 = arith.constant 0 : index
    %13 = vector.load %arg6[%c0_9, %c0_10] : memref<16x64xf32, #tpu.memory_space<vmem>>, vector<16x32xf32>
    tpu.vector_store %arg6[%c0_9, %c0_10], %1 {strides = array<i32>} : memref<16x64xf32, #tpu.memory_space<vmem>>, vector<16x32xf32>,
    %14 = arith.mulf %1, %1 : vector<16x32xf32>
    %c0_11 = arith.constant 0 : index
    %c32_12 = arith.constant 32 : index
    %15 = vector.load %arg6[%c0_11, %c32_12] : memref<16x64xf32, #tpu.memory_space<vmem>>, vector<16x32xf32>
    tpu.vector_store %arg6[%c0_11, %c32_12], %14 {strides = array<i32>} : memref<16x64xf32, #tpu.memory_space<vmem>>, vector<16x32xf32>,
    %c0_13 = arith.constant 0 : index
    %c0_14 = arith.constant 0 : index
    %16 = vector.load %arg5[%c0_13, %c0_14] : memref<8x64xf32, #tpu.memory_space<vmem>>, vector<8x64xf32>
    %c0_15 = arith.constant 0 : index
    %c0_16 = arith.constant 0 : index
    %17 = vector.load %arg6[%c0_15, %c0_16] : memref<16x64xf32, #tpu.memory_space<vmem>>, vector<16x64xf32>
    %cst_17 = arith.constant dense<0.000000e+00> : vector<8x16xf32>
    %18 = tpu.matmul %16, %17, %cst_17 {dimension_numbers = #tpu.dot_dimension_numbers<[1], [1], [0], [0], [0, 0, 1, 0], [], []>, precision = #tpu.contract_precision<fp32>} : vector<8x64xf32>, vector<16x64xf32>, vector<8x16xf32> -> vector<8x16xf32>
    %cst_18 = arith.constant dense<0xFF800000> : vector<8xf32>
    %19 = vector.multi_reduction <maximumf>, %18, %cst_18 [1] : vector<8x16xf32> to vector<8xf32>
    %20 = vector.shape_cast %19 : vector<8xf32> to vector<8x1xf32>
    %21 = vector.broadcast %20 : vector<8x1xf32> to vector<8x16xf32>
    %22 = arith.cmpf oeq, %18, %21 : vector<8x16xf32>
    %cst_19 = arith.constant 0xFF800000 : f32
    %23 = vector.broadcast %cst_19 : f32 to vector<8x16xf32>
    %24 = arith.select %22, %23, %18 : vector<8x16xi1>, vector<8x16xf32>
    %cst_20 = arith.constant dense<0xFF800000> : vector<8xf32>
    %25 = vector.multi_reduction <maximumf>, %24, %cst_20 [1] : vector<8x16xf32> to vector<8xf32>
    %26 = vector.shape_cast %25 : vector<8xf32> to vector<8x1xf32>
    %27 = vector.broadcast %26 : vector<8x1xf32> to vector<8x16xf32>
    %28 = arith.cmpf oeq, %24, %27 : vector<8x16xf32>
    %29 = arith.ori %22, %28 : vector<8x16xi1>
    %cst_21 = arith.constant 0xFF800000 : f32
    %30 = vector.broadcast %cst_21 : f32 to vector<8x16xf32>
    %31 = arith.select %28, %30, %24 : vector<8x16xi1>, vector<8x16xf32>
    %cst_22 = arith.constant dense<0xFF800000> : vector<8xf32>
    %32 = vector.multi_reduction <maximumf>, %31, %cst_22 [1] : vector<8x16xf32> to vector<8xf32>
    %33 = vector.shape_cast %32 : vector<8xf32> to vector<8x1xf32>
    %34 = vector.broadcast %33 : vector<8x1xf32> to vector<8x16xf32>
    %35 = arith.cmpf oeq, %31, %34 : vector<8x16xf32>
    %36 = arith.ori %29, %35 : vector<8x16xi1>
    %cst_23 = arith.constant 0xFF800000 : f32
    %37 = vector.broadcast %cst_23 : f32 to vector<8x16xf32>
    %38 = arith.select %35, %37, %31 : vector<8x16xi1>, vector<8x16xf32>
    %cst_24 = arith.constant dense<0xFF800000> : vector<8xf32>
    %39 = vector.multi_reduction <maximumf>, %38, %cst_24 [1] : vector<8x16xf32> to vector<8xf32>
    %40 = vector.shape_cast %39 : vector<8xf32> to vector<8x1xf32>
    %41 = vector.broadcast %40 : vector<8x1xf32> to vector<8x16xf32>
    %42 = arith.cmpf oeq, %38, %41 : vector<8x16xf32>
    %43 = arith.ori %36, %42 : vector<8x16xi1>
    %cst_25 = arith.constant 0xFF800000 : f32
    %44 = vector.broadcast %cst_25 : f32 to vector<8x16xf32>
    %45 = arith.select %42, %44, %38 : vector<8x16xi1>, vector<8x16xf32>
    %cst_26 = arith.constant dense<0xFF800000> : vector<8xf32>
    %46 = vector.multi_reduction <maximumf>, %45, %cst_26 [1] : vector<8x16xf32> to vector<8xf32>
    %47 = vector.shape_cast %46 : vector<8xf32> to vector<8x1xf32>
    %48 = vector.broadcast %47 : vector<8x1xf32> to vector<8x16xf32>
    %49 = arith.cmpf oeq, %45, %48 : vector<8x16xf32>
    %50 = arith.ori %43, %49 : vector<8x16xi1>
    %cst_27 = arith.constant 0xFF800000 : f32
    %51 = vector.broadcast %cst_27 : f32 to vector<8x16xf32>
    %52 = arith.select %49, %51, %45 : vector<8x16xi1>, vector<8x16xf32>
    %cst_28 = arith.constant dense<0xFF800000> : vector<8xf32>
    %53 = vector.multi_reduction <maximumf>, %52, %cst_28 [1] : vector<8x16xf32> to vector<8xf32>
    %54 = vector.shape_cast %53 : vector<8xf32> to vector<8x1xf32>
    %55 = vector.broadcast %54 : vector<8x1xf32> to vector<8x16xf32>
    %56 = arith.cmpf oeq, %52, %55 : vector<8x16xf32>
    %57 = arith.ori %50, %56 : vector<8x16xi1>
    %58 = vector.broadcast %20 : vector<8x1xf32> to vector<8x16xf32>
    %59 = arith.subf %18, %58 : vector<8x16xf32>
    %60 = math.exp %59 : vector<8x16xf32>
    %cst_29 = arith.constant 0.000000e+00 : f32
    %61 = vector.broadcast %cst_29 : f32 to vector<8x16xf32>
    %62 = arith.select %57, %60, %61 : vector<8x16xi1>, vector<8x16xf32>
    %cst_30 = arith.constant dense<0.000000e+00> : vector<8xf32>
    %63 = vector.multi_reduction <add>, %62, %cst_30 [1] : vector<8x16xf32> to vector<8xf32>
    %64 = vector.shape_cast %63 : vector<8xf32> to vector<8x1xf32>
    %65 = vector.broadcast %64 : vector<8x1xf32> to vector<8x16xf32>
    %66 = arith.divf %62, %65 : vector<8x16xf32>
    %cst_31 = arith.constant dense<0.000000e+00> : vector<8x32xf32>
    %67 = tpu.matmul %66, %1, %cst_31 {dimension_numbers = #tpu.dot_dimension_numbers<[1], [0], [0], [1], [0, 0, 1, 1], [], []>, precision = #tpu.contract_precision<fp32>} : vector<8x16xf32>, vector<16x32xf32>, vector<8x32xf32> -> vector<8x32xf32>
    %68 = arith.addf %0, %67 : vector<8x32xf32>
    %c0_32 = arith.constant 0 : index
    %c0_33 = arith.constant 0 : index
    %69 = vector.load %arg3[%c0_32, %c0_33] : memref<8x32xf32, #tpu.memory_space<vmem>>, vector<8x32xf32>
    tpu.vector_store %arg3[%c0_32, %c0_33], %68 {strides = array<i32>} : memref<8x32xf32, #tpu.memory_space<vmem>>, vector<8x32xf32>,
    %c1 = arith.constant 1 : index
    %c0_34 = arith.constant 0 : index
    %70 = vector.load %arg2[%c1, %c0_34] : memref<16x32xf32, #tpu.memory_space<vmem>>, vector<1x16xf32>
    %c8 = arith.constant 8 : index
    %c0_35 = arith.constant 0 : index
    %71 = vector.load %arg2[%c8, %c0_35] : memref<16x32xf32, #tpu.memory_space<vmem>>, vector<8x1xf32>
    %72 = vector.broadcast %70 : vector<1x16xf32> to vector<8x16xf32>
    %73 = vector.broadcast %71 : vector<8x1xf32> to vector<8x16xf32>
    %74 = arith.subf %72, %73 : vector<8x16xf32>
    %75 = math.absf %74 : vector<8x16xf32>
    %76 = arith.mulf %75, %66 : vector<8x16xf32>
    %77 = vector.shape_cast %76 : vector<8x16xf32> to vector<1x8x16xf32>
    %cst_36 = arith.constant dense<0.000000e+00> : vector<1xf32>
    %78 = vector.multi_reduction <add>, %77, %cst_36 [1, 2] : vector<1x8x16xf32> to vector<1xf32>
    %79 = vector.shape_cast %78 : vector<1xf32> to vector<1x1x1xf32>
    %80 = vector.extract %79[0, 0, 0] : f32 from vector<1x1x1xf32>
    %cst_37 = arith.constant 1.250000e-01 : f32
    %81 = arith.mulf %80, %cst_37 : f32
    %cst_38 = arith.constant 9.99999974E-5 : f32
    %82 = arith.addf %cst_38, %81 : f32
    %c0_39 = arith.constant 0 : index
    %c0_40 = arith.constant 0 : index
    %83 = memref.load %arg4[%c0_39, %c0_40] : memref<1x1xf32, #tpu.memory_space<smem>>
    memref.store %82, %arg4[%c0_39, %c0_40] : memref<1x1xf32, #tpu.memory_space<smem>>
    return
  }
}

</mosaic_0001>

<llo_original>
// kernel: gcn_forward.1
$region0: #{gcn_forward.1}
  #allocation0 [shape = 'u32[]', space=smem, size = 0x4, offset = 0x4, fixed_abs, tag = 'smem constant byte address 0x4 - core index']
  #allocation1 [shape = 'u32[144,128]{1,0:T(1,128)}', space=vmem, size = 0x12000, scoped, tag = 'internal scratch']
  #allocation2 [shape = 'f32[8,64]{1,0:T(8,128)}', space=vmem, size = 0x1000, scoped, tag = 'scratch operand']
  #allocation3 [shape = 'f32[16,64]{1,0:T(8,128)}', space=vmem, size = 0x2000, scoped, tag = 'scratch operand']
  %s0 = inlined_call_operand.vmem [shape: f32[8,32], index: 0, kind: input, shape index: {}]
  %s1 = inlined_call_operand.vmem [shape: f32[16,32], index: 1, kind: input, shape index: {}]
  %s2 = inlined_call_operand.vmem [shape: f32[16,32], index: 2, kind: input, shape index: {}]
  %s3 = inlined_call_operand.hbm [shape: f32[8,32], index: 3, kind: output, shape index: {0}]
  %s4 = inlined_call_operand.hbm [shape: f32[1,1], index: 4, kind: output, shape index: {1}]
  %5 = xla_tuple %s3, %s4
  %s6 = sld [smem:[#allocation0]]
  $region30: #{gcn_forward.1} parent=0
    _
  %s8 = ssub.s32 1, %s6
  %s9 = scalar_select 0, %s8, %s6
  $region1: #{gcn_forward.1} parent=0
    #allocation4 [shape = 'u8[4096]{0}', space=vmem, size = 0x1000, scoped, tag = 'output window, operand 0, single buffered']
    #allocation5 [shape = 's32[1]{0}', space=sflag, size = 0x4, scoped, tag = 'scoped memory for gcn_forward.1']
    #allocation6 [shape = 's32[1]{0}', space=sflag, size = 0x4, scoped, tag = 'scoped memory for gcn_forward.1']
    #allocation7 [shape = 'u8[512]{0}', space=smem, size = 0x200, scoped, tag = 'output window, operand 1, single buffered']
    %10 = vsyncpa [#allocation5], 0
    %11 = vsyncpa [#allocation6], 0
    // Predicated region
    $region2: #{gcn_forward.1} parent=1 // pred_check
      _
    $region3: #{gcn_forward.1} parent=1 // pred_check_branch
      %13 = sbr.rel (0) target = $region5
    $region4: #{gcn_forward.1} parent=1 // pred_region
      _
    $region5: #{gcn_forward.1} parent=1 // pred_fallthru
      _
    // Predicated region
    $region6: #{gcn_forward.1} parent=1 // pred_check
      _
    $region7: #{gcn_forward.1} parent=1 // pred_check_branch
      %15 = sbr.rel (0) target = $region9
    $region8: #{gcn_forward.1} parent=1 // pred_region
      _
    $region9: #{gcn_forward.1} parent=1 // pred_fallthru
      _
    // Predicated region
    $region10: #{gcn_forward.1} parent=1 // pred_check
      _
    $region11: #{gcn_forward.1} parent=1 // pred_check_branch
      %17 = sbr.rel (0) target = $region13
    $region12: #{gcn_forward.1} parent=1 // pred_region
      _
    $region13: #{gcn_forward.1} parent=1 // pred_fallthru
      _
    %v18 = vld [vmem:[%s0] sm:$0xff]
    %v19 = vld [vmem:[%s1] sm:$0xff]
    %v20 = vld [vmem:[%s1 + $0x8] sm:$0xff]
    %v21 = vld [vmem:[%s2] sm:$0x1]
    %v22 = vsub.f32 %v21, 0.03125
    %v23 = vmul.f32 %v22, -2.0
    %v24 = vlaneseq
    %v25 = vshrl.u32 %v24, 7
    %v26 = vsub.s32 0, %v25
    %v27 = vrot.slane %v23, %v26
    %v28 = vmul.f32 %v27, %v18
    %vm29 = vcmask 261120
    %30 = vst.msk [vmem:[#allocation2] sm:$0xff] %vm29, %v28
    %v31 = vlaneseq
    %v32 = vshrl.u32 %v31, 7
    %v33 = vsub.s32 0, %v32
    %v34 = vrot.slane %v22, %v33
    %36 = vrot.lane.b32.xlu0 %v34, 32
    %v37 = vpop.permute.xlu0 %36
    %vm39 = vcmask 523520
    %40 = vst.msk [vmem:[#allocation2] sm:$0xff] %vm39, %v37
    %41 = vst.msk [vmem:[#allocation3] sm:$0xff] %vm29, %v19
    %42 = vst.msk [vmem:[#allocation3 + $0x8] sm:$0xff] %vm29, %v20
    %v43 = vmul.f32 %v19, %v19
    %v44 = vmul.f32 %v20, %v20
    %47 = vrot.lane.b32.xlu0 %v43, 32
    %v48 = vpop.permute.xlu0 %47
    %49 = vrot.lane.b32.xlu0 %v44, 32
    %v50 = vpop.permute.xlu0 %49
    %53 = vst.msk [vmem:[#allocation3] sm:$0xff] %vm39, %v48
    %54 = vst.msk [vmem:[#allocation3 + $0x8] sm:$0xff] %vm39, %v50
    %v55 = vld [vmem:[#allocation2] sm:$0xff]
    %v56 = vld [vmem:[#allocation3] sm:$0xff]
    %v57 = vld [vmem:[#allocation3 + $0x8] sm:$0xff]
    %vm58 = vcmask 523264
    %v60 = vsel %vm58, %v55, 0
    %v63 = vsel %vm58, %v56, 0
    %v66 = vsel %vm58, %v57, 0
    %68 = vmatprep.subr.mxu0 0.0
    %v69 = vand.u32 %v63, 4294901760
    %70 = vmatpush1.xpose.msra.mxu0 %v69
    %71 = vmatprep.subr.mxu0 0.0
    %v72 = vand.u32 %v66, 4294901760
    %73 = vmatpush1.xpose.msra.mxu0 %v72
    %74 = vmatprep.subr.mxu0 0.0
    %75 = vmatpush1.xpose.msra.mxu0 0.0
    %76 = vmatprep.subr.mxu0 0.0
    %77 = vmatpush1.xpose.msra.mxu0 0.0
    %78 = vmatprep.subr.mxu0 0.0
    %79 = vmatpush1.xpose.msra.mxu0 0.0
    %80 = vmatprep.subr.mxu0 0.0
    %81 = vmatpush1.xpose.msra.mxu0 0.0
    %82 = vmatprep.subr.mxu0 0.0
    %83 = vmatpush1.xpose.msra.mxu0 0.0
    %84 = vmatprep.subr.mxu0 0.0
    %85 = vmatpush1.xpose.msra.mxu0 0.0
    %86 = vmatprep.subr.mxu0 0.0
    %87 = vmatpush1.xpose.msra.mxu0 0.0
    %88 = vmatprep.subr.mxu0 0.0
    %89 = vmatpush1.xpose.msra.mxu0 0.0
    %90 = vmatprep.subr.mxu0 0.0
    %91 = vmatpush1.xpose.msra.mxu0 0.0
    %92 = vmatprep.subr.mxu0 0.0
    %93 = vmatpush1.xpose.msra.mxu0 0.0
    %94 = vmatprep.subr.mxu0 0.0
    %95 = vmatpush1.xpose.msra.mxu0 0.0
    %96 = vmatprep.subr.mxu0 0.0
    %97 = vmatpush1.xpose.msra.mxu0 0.0
    %98 = vmatprep.subr.mxu0 0.0
    %99 = vmatpush1.xpose.msra.mxu0 0.0
    %100 = vmatprep.subr.mxu0 0.0
    %101 = vmatpush1.xpose.msra.mxu0 0.0
    %102 = vmatprep.subr.mxu0 0.0
    %103 = vmatpush1.xpose.msra.mxu0 0.0
    %104 = vmatprep.subr.mxu0 0.0
    %105 = vmatpush1.xpose.msra.mxu0 0.0
    %106 = vmatprep.subr.mxu0 0.0
    %107 = vmatpush1.xpose.msra.mxu0 0.0
    %108 = vmatprep.subr.mxu0 0.0
    %109 = vmatpush1.xpose.msra.mxu0 0.0
    %110 = vmatprep.subr.mxu0 0.0
    %111 = vmatpush1.xpose.msra.mxu0 0.0
    %112 = vmatprep.subr.mxu0 0.0
    %113 = vmatpush1.xpose.msra.mxu0 0.0
    %114 = vmatprep.subr.mxu0 0.0
    %115 = vmatpush1.xpose.msra.mxu0 0.0
    %116 = vmatprep.subr.mxu0 0.0
    %117 = vmatpush1.xpose.msra.mxu0 0.0
    %118 = vmatprep.subr.mxu0 0.0
    %119 = vmatpush1.xpose.msra.mxu0 0.0
    %120 = vmatprep.subr.mxu0 0.0
    %121 = vmatpush1.xpose.msra.mxu0 0.0
    %122 = vmatprep.subr.mxu0 0.0
    %123 = vmatpush1.xpose.msra.mxu0 0.0
    %124 = vmatprep.subr.mxu0 0.0
    %125 = vmatpush1.xpose.msra.mxu0 0.0
    %126 = vmatprep.subr.mxu0 0.0
    %127 = vmatpush1.xpose.msra.mxu0 0.0
    %128 = vmatprep.subr.mxu0 0.0
    %129 = vmatpush1.xpose.msra.mxu0 0.0
    %130 = vmatprep.subr.mxu0 0.0
    %131 = vmatpush1.xpose.msra.mxu0 0.0
    %132 = vmatprep.subr.mxu0 0.0
    %133 = vmatpush1.xpose.msra.mxu0 0.0
    %134 = vmatprep.mubr.f32.mxu0 0.0
    %v135 = vand.u32 %v60, 4294901760
    %v136 = vsub.f32 %v60, %v135
    %v137 = vand.u32 %v136, 4294901760
    %v138 = vsub.f32 %v136, %v137
    %v139 = vand.u32 %v138, 4294901760
    %140 = vmatmul.mubr.f32.gmra.mrb[0].mxu0 %v139
    %v141 = vpop.f32.mrb[0].mxu0
    %v142 = vadd.f32 0.0, %v141
    %v143 = vpop.f32.mrb[0].mxu0
    %144 = vdwg.mxu0
    %145 = vmatprep.subr.mxu0 0.0
    %v146 = vand.u32 %v63, 4294901760
    %v147 = vsub.f32 %v63, %v146
    %v148 = vand.u32 %v147, 4294901760
    %v149 = vsub.f32 %v147, %v148
    %v150 = vand.u32 %v149, 4294901760
    %151 = vmatpush1.xpose.msra.mxu0 %v150
    %152 = vmatprep.subr.mxu0 0.0
    %v153 = vand.u32 %v66, 4294901760
    %v154 = vsub.f32 %v66, %v153
    %v155 = vand.u32 %v154, 4294901760
    %v156 = vsub.f32 %v154, %v155
    %v157 = vand.u32 %v156, 4294901760
    %158 = vmatpush1.xpose.msra.mxu0 %v157
    %159 = vmatprep.subr.mxu0 0.0
    %160 = vmatpush1.xpose.msra.mxu0 0.0
    %161 = vmatprep.subr.mxu0 0.0
    %162 = vmatpush1.xpose.msra.mxu0 0.0
    %163 = vmatprep.subr.mxu0 0.0
    %164 = vmatpush1.xpose.msra.mxu0 0.0
    %165 = vmatprep.subr.mxu0 0.0
    %166 = vmatpush1.xpose.msra.mxu0 0.0
    %167 = vmatprep.subr.mxu0 0.0
    %168 = vmatpush1.xpose.msra.mxu0 0.0
    %169 = vmatprep.subr.mxu0 0.0
    %170 = vmatpush1.xpose.msra.mxu0 0.0
    %171 = vmatprep.subr.mxu0 0.0
    %172 = vmatpush1.xpose.msra.mxu0 0.0
    %173 = vmatprep.subr.mxu0 0.0
    %174 = vmatpush1.xpose.msra.mxu0 0.0
    %175 = vmatprep.subr.mxu0 0.0
    %176 = vmatpush1.xpose.msra.mxu0 0.0
    %177 = vmatprep.subr.mxu0 0.0
    %178 = vmatpush1.xpose.msra.mxu0 0.0
    %179 = vmatprep.subr.mxu0 0.0
    %180 = vmatpush1.xpose.msra.mxu0 0.0
    %181 = vmatprep.subr.mxu0 0.0
    %182 = vmatpush1.xpose.msra.mxu0 0.0
    %183 = vmatprep.subr.mxu0 0.0
    %184 = vmatpush1.xpose.msra.mxu0 0.0
    %185 = vmatprep.subr.mxu0 0.0
    %186 = vmatpush1.xpose.msra.mxu0 0.0
    %187 = vmatprep.subr.mxu0 0.0
    %188 = vmatpush1.xpose.msra.mxu0 0.0
    %189 = vmatprep.subr.mxu0 0.0
    %190 = vmatpush1.xpose.msra.mxu0 0.0
    %191 = vmatprep.subr.mxu0 0.0
    %192 = vmatpush1.xpose.msra.mxu0 0.0
    %193 = vmatprep.subr.mxu0 0.0
    %194 = vmatpush1.xpose.msra.mxu0 0.0
    %195 = vmatprep.subr.mxu0 0.0
    %196 = vmatpush1.xpose.msra.mxu0 0.0
    %197 = vmatprep.subr.mxu0 0.0
    %198 = vmatpush1.xpose.msra.mxu0 0.0
    %199 = vmatprep.subr.mxu0 0.0
    %200 = vmatpush1.xpose.msra.mxu0 0.0
    %201 = vmatprep.subr.mxu0 0.0
    %202 = vmatpush1.xpose.msra.mxu0 0.0
    %203 = vmatprep.subr.mxu0 0.0
    %204 = vmatpush1.xpose.msra.mxu0 0.0
    %205 = vmatprep.subr.mxu0 0.0
    %206 = vmatpush1.xpose.msra.mxu0 0.0
    %207 = vmatprep.subr.mxu0 0.0
    %208 = vmatpush1.xpose.msra.mxu0 0.0
    %209 = vmatprep.subr.mxu0 0.0
    %210 = vmatpush1.xpose.msra.mxu0 0.0
    %211 = vmatprep.subr.mxu0 0.0
    %212 = vmatpush1.xpose.msra.mxu0 0.0
    %213 = vmatprep.subr.mxu0 0.0
    %214 = vmatpush1.xpose.msra.mxu0 0.0
    %215 = vmatprep.subr.mxu0 0.0
    %216 = vmatpush1.xpose.msra.mxu0 0.0
    %217 = vmatprep.subr.mxu0 0.0
    %218 = vmatpush1.xpose.msra.mxu0 0.0
    %219 = vmatprep.mubr.f32.mxu0 0.0
    %v220 = vand.u32 %v60, 4294901760
    %221 = vmatmul.mubr.f32.gmra.mrb[0].mxu0 %v220
    %v222 = vpop.f32.mrb[0].mxu0
    %v223 = vadd.f32 %v142, %v222
    %v224 = vpop.f32.mrb[0].mxu0
    %225 = vdwg.mxu0
    %226 = vmatprep.subr.mxu0 0.0
    %v227 = vand.u32 %v63, 4294901760
    %v228 = vsub.f32 %v63, %v227
    %229 = vmatpush1.xpose.msra.mxu0 %v228
    %230 = vmatprep.subr.mxu0 0.0
    %v231 = vand.u32 %v66, 4294901760
    %v232 = vsub.f32 %v66, %v231
    %233 = vmatpush1.xpose.msra.mxu0 %v232
    %234 = vmatprep.subr.mxu0 0.0
    %235 = vmatpush1.xpose.msra.mxu0 0.0
    %236 = vmatprep.subr.mxu0 0.0
    %237 = vmatpush1.xpose.msra.mxu0 0.0
    %238 = vmatprep.subr.mxu0 0.0
    %239 = vmatpush1.xpose.msra.mxu0 0.0
    %240 = vmatprep.subr.mxu0 0.0
    %241 = vmatpush1.xpose.msra.mxu0 0.0
    %242 = vmatprep.subr.mxu0 0.0
    %243 = vmatpush1.xpose.msra.mxu0 0.0
    %244 = vmatprep.subr.mxu0 0.0
    %245 = vmatpush1.xpose.msra.mxu0 0.0
    %246 = vmatprep.subr.mxu0 0.0
    %247 = vmatpush1.xpose.msra.mxu0 0.0
    %248 = vmatprep.subr.mxu0 0.0
    %249 = vmatpush1.xpose.msra.mxu0 0.0
    %250 = vmatprep.subr.mxu0 0.0
    %251 = vmatpush1.xpose.msra.mxu0 0.0
    %252 = vmatprep.subr.mxu0 0.0
    %253 = vmatpush1.xpose.msra.mxu0 0.0
    %254 = vmatprep.subr.mxu0 0.0
    %255 = vmatpush1.xpose.msra.mxu0 0.0
    %256 = vmatprep.subr.mxu0 0.0
    %257 = vmatpush1.xpose.msra.mxu0 0.0
    %258 = vmatprep.subr.mxu0 0.0
    %259 = vmatpush1.xpose.msra.mxu0 0.0
    %260 = vmatprep.subr.mxu0 0.0
    %261 = vmatpush1.xpose.msra.mxu0 0.0
    %262 = vmatprep.subr.mxu0 0.0
    %263 = vmatpush1.xpose.msra.mxu0 0.0
    %264 = vmatprep.subr.mxu0 0.0
    %265 = vmatpush1.xpose.msra.mxu0 0.0
    %266 = vmatprep.subr.mxu0 0.0
    %267 = vmatpush1.xpose.msra.mxu0 0.0
    %268 = vmatprep.subr.mxu0 0.0
    %269 = vmatpush1.xpose.msra.mxu0 0.0
    %270 = vmatprep.subr.mxu0 0.0
    %271 = vmatpush1.xpose.msra.mxu0 0.0
    %272 = vmatprep.subr.mxu0 0.0
    %273 = vmatpush1.xpose.msra.mxu0 0.0
    %274 = vmatprep.subr.mxu0 0.0
    %275 = vmatpush1.xpose.msra.mxu0 0.0
    %276 = vmatprep.subr.mxu0 0.0
    %277 = vmatpush1.xpose.msra.mxu0 0.0
    %278 = vmatprep.subr.mxu0 0.0
    %279 = vmatpush1.xpose.msra.mxu0 0.0
    %280 = vmatprep.subr.mxu0 0.0
    %281 = vmatpush1.xpose.msra.mxu0 0.0
    %282 = vmatprep.subr.mxu0 0.0
    %283 = vmatpush1.xpose.msra.mxu0 0.0
    %284 = vmatprep.subr.mxu0 0.0
    %285 = vmatpush1.xpose.msra.mxu0 0.0
    %286 = vmatprep.subr.mxu0 0.0
    %287 = vmatpush1.xpose.msra.mxu0 0.0
    %288 = vmatprep.subr.mxu0 0.0
    %289 = vmatpush1.xpose.msra.mxu0 0.0
    %290 = vmatprep.subr.mxu0 0.0
    %291 = vmatpush1.xpose.msra.mxu0 0.0
    %292 = vmatprep.subr.mxu0 0.0
    %293 = vmatpush1.xpose.msra.mxu0 0.0
    %294 = vmatprep.mubr.f32.mxu0 0.0
    %v295 = vand.u32 %v60, 4294901760
    %v296 = vsub.f32 %v60, %v295
    %297 = vmatmul.mubr.f32.gmra.mrb[0].mxu0 %v296
    %v298 = vpop.f32.mrb[0].mxu0
    %v299 = vadd.f32 %v223, %v298
    %v300 = vpop.f32.mrb[0].mxu0
    %301 = vdwg.mxu0
    %302 = vmatprep.subr.mxu0 0.0
    %v303 = vand.u32 %v63, 4294901760
    %304 = vmatpush1.xpose.msra.mxu0 %v303
    %305 = vmatprep.subr.mxu0 0.0
    %v306 = vand.u32 %v66, 4294901760
    %307 = vmatpush1.xpose.msra.mxu0 %v306
    %308 = vmatprep.subr.mxu0 0.0
    %309 = vmatpush1.xpose.msra.mxu0 0.0
    %310 = vmatprep.subr.mxu0 0.0
    %311 = vmatpush1.xpose.msra.mxu0 0.0
    %312 = vmatprep.subr.mxu0 0.0
    %313 = vmatpush1.xpose.msra.mxu0 0.0
    %314 = vmatprep.subr.mxu0 0.0
    %315 = vmatpush1.xpose.msra.mxu0 0.0
    %316 = vmatprep.subr.mxu0 0.0
    %317 = vmatpush1.xpose.msra.mxu0 0.0
    %318 = vmatprep.subr.mxu0 0.0
    %319 = vmatpush1.xpose.msra.mxu0 0.0
    %320 = vmatprep.subr.mxu0 0.0
    %321 = vmatpush1.xpose.msra.mxu0 0.0
    %322 = vmatprep.subr.mxu0 0.0
    %323 = vmatpush1.xpose.msra.mxu0 0.0
    %324 = vmatprep.subr.mxu0 0.0
    %325 = vmatpush1.xpose.msra.mxu0 0.0
    %326 = vmatprep.subr.mxu0 0.0
    %327 = vmatpush1.xpose.msra.mxu0 0.0
    %328 = vmatprep.subr.mxu0 0.0
    %329 = vmatpush1.xpose.msra.mxu0 0.0
    %330 = vmatprep.subr.mxu0 0.0
    %331 = vmatpush1.xpose.msra.mxu0 0.0
    %332 = vmatprep.subr.mxu0 0.0
    %333 = vmatpush1.xpose.msra.mxu0 0.0
    %334 = vmatprep.subr.mxu0 0.0
    %335 = vmatpush1.xpose.msra.mxu0 0.0
    %336 = vmatprep.subr.mxu0 0.0
    %337 = vmatpush1.xpose.msra.mxu0 0.0
    %338 = vmatprep.subr.mxu0 0.0
    %339 = vmatpush1.xpose.msra.mxu0 0.0
    %340 = vmatprep.subr.mxu0 0.0
    %341 = vmatpush1.xpose.msra.mxu0 0.0
    %342 = vmatprep.subr.mxu0 0.0
    %343 = vmatpush1.xpose.msra.mxu0 0.0
    %344 = vmatprep.subr.mxu0 0.0
    %345 = vmatpush1.xpose.msra.mxu0 0.0
    %346 = vmatprep.subr.mxu0 0.0
    %347 = vmatpush1.xpose.msra.mxu0 0.0
    %348 = vmatprep.subr.mxu0 0.0
    %349 = vmatpush1.xpose.msra.mxu0 0.0
    %350 = vmatprep.subr.mxu0 0.0
    %351 = vmatpush1.xpose.msra.mxu0 0.0
    %352 = vmatprep.subr.mxu0 0.0
    %353 = vmatpush1.xpose.msra.mxu0 0.0
    %354 = vmatprep.subr.mxu0 0.0
    %355 = vmatpush1.xpose.msra.mxu0 0.0
    %356 = vmatprep.subr.mxu0 0.0
    %357 = vmatpush1.xpose.msra.mxu0 0.0
    %358 = vmatprep.subr.mxu0 0.0
    %359 = vmatpush1.xpose.msra.mxu0 0.0
    %360 = vmatprep.subr.mxu0 0.0
    %361 = vmatpush1.xpose.msra.mxu0 0.0
    %362 = vmatprep.subr.mxu0 0.0
    %363 = vmatpush1.xpose.msra.mxu0 0.0
    %364 = vmatprep.subr.mxu0 0.0
    %365 = vmatpush1.xpose.msra.mxu0 0.0
    %366 = vmatprep.subr.mxu0 0.0
    %367 = vmatpush1.xpose.msra.mxu0 0.0
    %368 = vmatprep.mubr.f32.mxu0 0.0
    %v369 = vand.u32 %v60, 4294901760
    %v370 = vsub.f32 %v60, %v369
    %v371 = vand.u32 %v370, 4294901760
    %372 = vmatmul.mubr.f32.gmra.mrb[0].mxu0 %v371
    %v373 = vpop.f32.mrb[0].mxu0
    %v374 = vadd.f32 %v299, %v373
    %v375 = vpop.f32.mrb[0].mxu0
    %376 = vdwg.mxu0
    %377 = vmatprep.subr.mxu0 0.0
    %v378 = vand.u32 %v63, 4294901760
    %v379 = vsub.f32 %v63, %v378
    %v380 = vand.u32 %v379, 4294901760
    %381 = vmatpush1.xpose.msra.mxu0 %v380
    %382 = vmatprep.subr.mxu0 0.0
    %v383 = vand.u32 %v66, 4294901760
    %v384 = vsub.f32 %v66, %v383
    %v385 = vand.u32 %v384, 4294901760
    %386 = vmatpush1.xpose.msra.mxu0 %v385
    %387 = vmatprep.subr.mxu0 0.0
    %388 = vmatpush1.xpose.msra.mxu0 0.0
    %389 = vmatprep.subr.mxu0 0.0
    %390 = vmatpush1.xpose.msra.mxu0 0.0
    %391 = vmatprep.subr.mxu0 0.0
    %392 = vmatpush1.xpose.msra.mxu0 0.0
    %393 = vmatprep.subr.mxu0 0.0
    %394 = vmatpush1.xpose.msra.mxu0 0.0
    %395 = vmatprep.subr.mxu0 0.0
    %396 = vmatpush1.xpose.msra.mxu0 0.0
    %397 = vmatprep.subr.mxu0 0.0
    %398 = vmatpush1.xpose.msra.mxu0 0.0
    %399 = vmatprep.subr.mxu0 0.0
    %400 = vmatpush1.xpose.msra.mxu0 0.0
    %401 = vmatprep.subr.mxu0 0.0
    %402 = vmatpush1.xpose.msra.mxu0 0.0
    %403 = vmatprep.subr.mxu0 0.0
    %404 = vmatpush1.xpose.msra.mxu0 0.0
    %405 = vmatprep.subr.mxu0 0.0
    %406 = vmatpush1.xpose.msra.mxu0 0.0
    %407 = vmatprep.subr.mxu0 0.0
    %408 = vmatpush1.xpose.msra.mxu0 0.0
    %409 = vmatprep.subr.mxu0 0.0
    %410 = vmatpush1.xpose.msra.mxu0 0.0
    %411 = vmatprep.subr.mxu0 0.0
    %412 = vmatpush1.xpose.msra.mxu0 0.0
    %413 = vmatprep.subr.mxu0 0.0
    %414 = vmatpush1.xpose.msra.mxu0 0.0
    %415 = vmatprep.subr.mxu0 0.0
    %416 = vmatpush1.xpose.msra.mxu0 0.0
    %417 = vmatprep.subr.mxu0 0.0
    %418 = vmatpush1.xpose.msra.mxu0 0.0
    %419 = vmatprep.subr.mxu0 0.0
    %420 = vmatpush1.xpose.msra.mxu0 0.0
    %421 = vmatprep.subr.mxu0 0.0
    %422 = vmatpush1.xpose.msra.mxu0 0.0
    %423 = vmatprep.subr.mxu0 0.0
    %424 = vmatpush1.xpose.msra.mxu0 0.0
    %425 = vmatprep.subr.mxu0 0.0
    %426 = vmatpush1.xpose.msra.mxu0 0.0
    %427 = vmatprep.subr.mxu0 0.0
    %428 = vmatpush1.xpose.msra.mxu0 0.0
    %429 = vmatprep.subr.mxu0 0.0
    %430 = vmatpush1.xpose.msra.mxu0 0.0
    %431 = vmatprep.subr.mxu0 0.0
    %432 = vmatpush1.xpose.msra.mxu0 0.0
    %433 = vmatprep.subr.mxu0 0.0
    %434 = vmatpush1.xpose.msra.mxu0 0.0
    %435 = vmatprep.subr.mxu0 0.0
    %436 = vmatpush1.xpose.msra.mxu0 0.0
    %437 = vmatprep.subr.mxu0 0.0
    %438 = vmatpush1.xpose.msra.mxu0 0.0
    %439 = vmatprep.subr.mxu0 0.0
    %440 = vmatpush1.xpose.msra.mxu0 0.0
    %441 = vmatprep.subr.mxu0 0.0
    %442 = vmatpush1.xpose.msra.mxu0 0.0
    %443 = vmatprep.subr.mxu0 0.0
    %444 = vmatpush1.xpose.msra.mxu0 0.0
    %445 = vmatprep.subr.mxu0 0.0
    %446 = vmatpush1.xpose.msra.mxu0 0.0
    %447 = vmatprep.mubr.f32.mxu0 0.0
    %v448 = vand.u32 %v60, 4294901760
    %449 = vmatmul.mubr.f32.gmra.mrb[0].mxu0 %v448
    %v450 = vpop.f32.mrb[0].mxu0
    %v451 = vadd.f32 %v374, %v450
    %v452 = vpop.f32.mrb[0].mxu0
    %453 = vdwg.mxu0
    %454 = vmatprep.subr.mxu0 0.0
    %v455 = vand.u32 %v63, 4294901760
    %456 = vmatpush1.xpose.msra.mxu0 %v455
    %457 = vmatprep.subr.mxu0 0.0
    %v458 = vand.u32 %v66, 4294901760
    %459 = vmatpush1.xpose.msra.mxu0 %v458
    %460 = vmatprep.subr.mxu0 0.0
    %461 = vmatpush1.xpose.msra.mxu0 0.0
    %462 = vmatprep.subr.mxu0 0.0
    %463 = vmatpush1.xpose.msra.mxu0 0.0
    %464 = vmatprep.subr.mxu0 0.0
    %465 = vmatpush1.xpose.msra.mxu0 0.0
    %466 = vmatprep.subr.mxu0 0.0
    %467 = vmatpush1.xpose.msra.mxu0 0.0
    %468 = vmatprep.subr.mxu0 0.0
    %469 = vmatpush1.xpose.msra.mxu0 0.0
    %470 = vmatprep.subr.mxu0 0.0
    %471 = vmatpush1.xpose.msra.mxu0 0.0
    %472 = vmatprep.subr.mxu0 0.0
    %473 = vmatpush1.xpose.msra.mxu0 0.0
    %474 = vmatprep.subr.mxu0 0.0
    %475 = vmatpush1.xpose.msra.mxu0 0.0
    %476 = vmatprep.subr.mxu0 0.0
    %477 = vmatpush1.xpose.msra.mxu0 0.0
    %478 = vmatprep.subr.mxu0 0.0
    %479 = vmatpush1.xpose.msra.mxu0 0.0
    %480 = vmatprep.subr.mxu0 0.0
    %481 = vmatpush1.xpose.msra.mxu0 0.0
    %482 = vmatprep.subr.mxu0 0.0
    %483 = vmatpush1.xpose.msra.mxu0 0.0
    %484 = vmatprep.subr.mxu0 0.0
    %485 = vmatpush1.xpose.msra.mxu0 0.0
    %486 = vmatprep.subr.mxu0 0.0
    %487 = vmatpush1.xpose.msra.mxu0 0.0
    %488 = vmatprep.subr.mxu0 0.0
    %489 = vmatpush1.xpose.msra.mxu0 0.0
    %490 = vmatprep.subr.mxu0 0.0
    %491 = vmatpush1.xpose.msra.mxu0 0.0
    %492 = vmatprep.subr.mxu0 0.0
    %493 = vmatpush1.xpose.msra.mxu0 0.0
    %494 = vmatprep.subr.mxu0 0.0
    %495 = vmatpush1.xpose.msra.mxu0 0.0
    %496 = vmatprep.subr.mxu0 0.0
    %497 = vmatpush1.xpose.msra.mxu0 0.0
    %498 = vmatprep.subr.mxu0 0.0
    %499 = vmatpush1.xpose.msra.mxu0 0.0
    %500 = vmatprep.subr.mxu0 0.0
    %501 = vmatpush1.xpose.msra.mxu0 0.0
    %502 = vmatprep.subr.mxu0 0.0
    %503 = vmatpush1.xpose.msra.mxu0 0.0
    %504 = vmatprep.subr.mxu0 0.0
    %505 = vmatpush1.xpose.msra.mxu0 0.0
    %506 = vmatprep.subr.mxu0 0.0
    %507 = vmatpush1.xpose.msra.mxu0 0.0
    %508 = vmatprep.subr.mxu0 0.0
    %509 = vmatpush1.xpose.msra.mxu0 0.0
    %510 = vmatprep.subr.mxu0 0.0
    %511 = vmatpush1.xpose.msra.mxu0 0.0
    %512 = vmatprep.subr.mxu0 0.0
    %513 = vmatpush1.xpose.msra.mxu0 0.0
    %514 = vmatprep.subr.mxu0 0.0
    %515 = vmatpush1.xpose.msra.mxu0 0.0
    %516 = vmatprep.subr.mxu0 0.0
    %517 = vmatpush1.xpose.msra.mxu0 0.0
    %518 = vmatprep.subr.mxu0 0.0
    %519 = vmatpush1.xpose.msra.mxu0 0.0
    %520 = vmatprep.mubr.f32.mxu0 0.0
    %v521 = vand.u32 %v60, 4294901760
    %522 = vmatmul.mubr.f32.gmra.mrb[0].mxu0 %v521
    %v523 = vpop.f32.mrb[0].mxu0
    %v524 = vadd.f32 %v451, %v523
    %v525 = vpop.f32.mrb[0].mxu0
    %526 = vdwg.mxu0
    %vm527 = vcmask 130048
    %v528 = vsel %vm527, %v524, -inf
    %529 = vmax.xlane.f32.xlu0 %v528
    %v530 = vpop.xlane.xlu0 %529
    %vm531 = vcmp.eq.f32.partialorder %v524, %v530
    %v532 = vsel %vm531, -inf, %v524
    %v533 = vsel %vm527, %v532, -inf
    %534 = vmax.xlane.f32.xlu0 %v533
    %v535 = vpop.xlane.xlu0 %534
    %vm536 = vcmp.eq.f32.partialorder %v532, %v535
    %vm537 = vmor %vm531, %vm536
    %v538 = vsel %vm536, -inf, %v532
    %v539 = vsel %vm527, %v538, -inf
    %540 = vmax.xlane.f32.xlu0 %v539
    %v541 = vpop.xlane.xlu0 %540
    %vm542 = vcmp.eq.f32.partialorder %v538, %v541
    %vm543 = vmor %vm537, %vm542
    %v544 = vsel %vm542, -inf, %v538
    %v545 = vsel %vm527, %v544, -inf
    %546 = vmax.xlane.f32.xlu0 %v545
    %v547 = vpop.xlane.xlu0 %546
    %vm548 = vcmp.eq.f32.partialorder %v544, %v547
    %vm549 = vmor %vm543, %vm548
    %v550 = vsel %vm548, -inf, %v544
    %v551 = vsel %vm527, %v550, -inf
    %552 = vmax.xlane.f32.xlu0 %v551
    %v553 = vpop.xlane.xlu0 %552
    %vm554 = vcmp.eq.f32.partialorder %v550, %v553
    %vm555 = vmor %vm549, %vm554
    %v556 = vsel %vm554, -inf, %v550
    %v557 = vsel %vm527, %v556, -inf
    %558 = vmax.xlane.f32.xlu0 %v557
    %v559 = vpop.xlane.xlu0 %558
    %vm560 = vcmp.eq.f32.partialorder %v556, %v559
    %vm561 = vmor %vm555, %vm560
    %v562 = vsub.f32 %v524, %v530
    %v563 = vmul.f32 %v562, 1.442695
    %v564 = vpow.pop %v563
    %v565 = vsel %vm561, %v564, 0.0
    %v566 = vsel %vm527, %v565, 0.0
    %567 = vadd.xlane.f32.xlu0 %v566
    %v568 = vpop.xlane.xlu0 %567
    %v569 = vrcp.pop %v568
    %v570 = vmul.f32 %v565, %v569
    %v572 = vsel %vm527, %v570, 0
    %574 = vmatprep.subr.mxu0 0.0
    %v575 = vand.u32 %v19, 4294901760
    %576 = vmatpush1.msra.mxu0 %v575
    %577 = vmatprep.subr.mxu0 0.0
    %v578 = vand.u32 %v20, 4294901760
    %579 = vmatpush1.msra.mxu0 %v578
    %580 = vmatprep.subr.mxu0 0.0
    %581 = vmatpush1.msra.mxu0 0.0
    %582 = vmatprep.subr.mxu0 0.0
    %583 = vmatpush1.msra.mxu0 0.0
    %584 = vmatprep.subr.mxu0 0.0
    %585 = vmatpush1.msra.mxu0 0.0
    %586 = vmatprep.subr.mxu0 0.0
    %587 = vmatpush1.msra.mxu0 0.0
    %588 = vmatprep.subr.mxu0 0.0
    %589 = vmatpush1.msra.mxu0 0.0
    %590 = vmatprep.subr.mxu0 0.0
    %591 = vmatpush1.msra.mxu0 0.0
    %592 = vmatprep.subr.mxu0 0.0
    %593 = vmatpush1.msra.mxu0 0.0
    %594 = vmatprep.subr.mxu0 0.0
    %595 = vmatpush1.msra.mxu0 0.0
    %596 = vmatprep.subr.mxu0 0.0
    %597 = vmatpush1.msra.mxu0 0.0
    %598 = vmatprep.subr.mxu0 0.0
    %599 = vmatpush1.msra.mxu0 0.0
    %600 = vmatprep.subr.mxu0 0.0
    %601 = vmatpush1.msra.mxu0 0.0
    %602 = vmatprep.subr.mxu0 0.0
    %603 = vmatpush1.msra.mxu0 0.0
    %604 = vmatprep.subr.mxu0 0.0
    %605 = vmatpush1.msra.mxu0 0.0
    %606 = vmatprep.subr.mxu0 0.0
    %607 = vmatpush1.msra.mxu0 0.0
    %608 = vmatprep.subr.mxu0 0.0
    %609 = vmatpush1.msra.mxu0 0.0
    %610 = vmatprep.subr.mxu0 0.0
    %611 = vmatpush1.msra.mxu0 0.0
    %612 = vmatprep.subr.mxu0 0.0
    %613 = vmatpush1.msra.mxu0 0.0
    %614 = vmatprep.subr.mxu0 0.0
    %615 = vmatpush1.msra.mxu0 0.0
    %616 = vmatprep.subr.mxu0 0.0
    %617 = vmatpush1.msra.mxu0 0.0
    %618 = vmatprep.subr.mxu0 0.0
    %619 = vmatpush1.msra.mxu0 0.0
    %620 = vmatprep.subr.mxu0 0.0
    %621 = vmatpush1.msra.mxu0 0.0
    %622 = vmatprep.subr.mxu0 0.0
    %623 = vmatpush1.msra.mxu0 0.0
    %624 = vmatprep.subr.mxu0 0.0
    %625 = vmatpush1.msra.mxu0 0.0
    %626 = vmatprep.subr.mxu0 0.0
    %627 = vmatpush1.msra.mxu0 0.0
    %628 = vmatprep.subr.mxu0 0.0
    %629 = vmatpush1.msra.mxu0 0.0
    %630 = vmatprep.subr.mxu0 0.0
    %631 = vmatpush1.msra.mxu0 0.0
    %632 = vmatprep.subr.mxu0 0.0
    %633 = vmatpush1.msra.mxu0 0.0
    %634 = vmatprep.subr.mxu0 0.0
    %635 = vmatpush1.msra.mxu0 0.0
    %636 = vmatprep.subr.mxu0 0.0
    %637 = vmatpush1.msra.mxu0 0.0
    %638 = vmatprep.subr.mxu0 0.0
    %639 = vmatpush1.msra.mxu0 0.0
    %640 = vmatprep.mubr.f32.mxu0 0.0
    %v641 = vand.u32 %v572, 4294901760
    %v642 = vsub.f32 %v572, %v641
    %v643 = vand.u32 %v642, 4294901760
    %v644 = vsub.f32 %v642, %v643
    %v645 = vand.u32 %v644, 4294901760
    %646 = vmatmul.mubr.f32.gmra.mrb[0].mxu0 %v645
    %v647 = vpop.f32.mrb[0].mxu0
    %v648 = vadd.f32 0.0, %v647
    %v649 = vpop.f32.mrb[0].mxu0
    %650 = vdwg.mxu0
    %651 = vmatprep.subr.mxu0 0.0
    %v652 = vand.u32 %v19, 4294901760
    %v653 = vsub.f32 %v19, %v652
    %v654 = vand.u32 %v653, 4294901760
    %v655 = vsub.f32 %v653, %v654
    %v656 = vand.u32 %v655, 4294901760
    %657 = vmatpush1.msra.mxu0 %v656
    %658 = vmatprep.subr.mxu0 0.0
    %v659 = vand.u32 %v20, 4294901760
    %v660 = vsub.f32 %v20, %v659
    %v661 = vand.u32 %v660, 4294901760
    %v662 = vsub.f32 %v660, %v661
    %v663 = vand.u32 %v662, 4294901760
    %664 = vmatpush1.msra.mxu0 %v663
    %665 = vmatprep.subr.mxu0 0.0
    %666 = vmatpush1.msra.mxu0 0.0
    %667 = vmatprep.subr.mxu0 0.0
    %668 = vmatpush1.msra.mxu0 0.0
    %669 = vmatprep.subr.mxu0 0.0
    %670 = vmatpush1.msra.mxu0 0.0
    %671 = vmatprep.subr.mxu0 0.0
    %672 = vmatpush1.msra.mxu0 0.0
    %673 = vmatprep.subr.mxu0 0.0
    %674 = vmatpush1.msra.mxu0 0.0
    %675 = vmatprep.subr.mxu0 0.0
    %676 = vmatpush1.msra.mxu0 0.0
    %677 = vmatprep.subr.mxu0 0.0
    %678 = vmatpush1.msra.mxu0 0.0
    %679 = vmatprep.subr.mxu0 0.0
    %680 = vmatpush1.msra.mxu0 0.0
    %681 = vmatprep.subr.mxu0 0.0
    %682 = vmatpush1.msra.mxu0 0.0
    %683 = vmatprep.subr.mxu0 0.0
    %684 = vmatpush1.msra.mxu0 0.0
    %685 = vmatprep.subr.mxu0 0.0
    %686 = vmatpush1.msra.mxu0 0.0
    %687 = vmatprep.subr.mxu0 0.0
    %688 = vmatpush1.msra.mxu0 0.0
    %689 = vmatprep.subr.mxu0 0.0
    %690 = vmatpush1.msra.mxu0 0.0
    %691 = vmatprep.subr.mxu0 0.0
    %692 = vmatpush1.msra.mxu0 0.0
    %693 = vmatprep.subr.mxu0 0.0
    %694 = vmatpush1.msra.mxu0 0.0
    %695 = vmatprep.subr.mxu0 0.0
    %696 = vmatpush1.msra.mxu0 0.0
    %697 = vmatprep.subr.mxu0 0.0
    %698 = vmatpush1.msra.mxu0 0.0
    %699 = vmatprep.subr.mxu0 0.0
    %700 = vmatpush1.msra.mxu0 0.0
    %701 = vmatprep.subr.mxu0 0.0
    %702 = vmatpush1.msra.mxu0 0.0
    %703 = vmatprep.subr.mxu0 0.0
    %704 = vmatpush1.msra.mxu0 0.0
    %705 = vmatprep.subr.mxu0 0.0
    %706 = vmatpush1.msra.mxu0 0.0
    %707 = vmatprep.subr.mxu0 0.0
    %708 = vmatpush1.msra.mxu0 0.0
    %709 = vmatprep.subr.mxu0 0.0
    %710 = vmatpush1.msra.mxu0 0.0
    %711 = vmatprep.subr.mxu0 0.0
    %712 = vmatpush1.msra.mxu0 0.0
    %713 = vmatprep.subr.mxu0 0.0
    %714 = vmatpush1.msra.mxu0 0.0
    %715 = vmatprep.subr.mxu0 0.0
    %716 = vmatpush1.msra.mxu0 0.0
    %717 = vmatprep.subr.mxu0 0.0
    %718 = vmatpush1.msra.mxu0 0.0
    %719 = vmatprep.subr.mxu0 0.0
    %720 = vmatpush1.msra.mxu0 0.0
    %721 = vmatprep.subr.mxu0 0.0
    %722 = vmatpush1.msra.mxu0 0.0
    %723 = vmatprep.subr.mxu0 0.0
    %724 = vmatpush1.msra.mxu0 0.0
    %725 = vmatprep.mubr.f32.mxu0 0.0
    %v726 = vand.u32 %v572, 4294901760
    %727 = vmatmul.mubr.f32.gmra.mrb[0].mxu0 %v726
    %v728 = vpop.f32.mrb[0].mxu0
    %v729 = vadd.f32 %v648, %v728
    %v730 = vpop.f32.mrb[0].mxu0
    %731 = vdwg.mxu0
    %732 = vmatprep.subr.mxu0 0.0
    %v733 = vand.u32 %v19, 4294901760
    %v734 = vsub.f32 %v19, %v733
    %735 = vmatpush1.msra.mxu0 %v734
    %736 = vmatprep.subr.mxu0 0.0
    %v737 = vand.u32 %v20, 4294901760
    %v738 = vsub.f32 %v20, %v737
    %739 = vmatpush1.msra.mxu0 %v738
    %740 = vmatprep.subr.mxu0 0.0
    %741 = vmatpush1.msra.mxu0 0.0
    %742 = vmatprep.subr.mxu0 0.0
    %743 = vmatpush1.msra.mxu0 0.0
    %744 = vmatprep.subr.mxu0 0.0
    %745 = vmatpush1.msra.mxu0 0.0
    %746 = vmatprep.subr.mxu0 0.0
    %747 = vmatpush1.msra.mxu0 0.0
    %748 = vmatprep.subr.mxu0 0.0
    %749 = vmatpush1.msra.mxu0 0.0
    %750 = vmatprep.subr.mxu0 0.0
    %751 = vmatpush1.msra.mxu0 0.0
    %752 = vmatprep.subr.mxu0 0.0
    %753 = vmatpush1.msra.mxu0 0.0
    %754 = vmatprep.subr.mxu0 0.0
    %755 = vmatpush1.msra.mxu0 0.0
    %756 = vmatprep.subr.mxu0 0.0
    %757 = vmatpush1.msra.mxu0 0.0
    %758 = vmatprep.subr.mxu0 0.0
    %759 = vmatpush1.msra.mxu0 0.0
    %760 = vmatprep.subr.mxu0 0.0
    %761 = vmatpush1.msra.mxu0 0.0
    %762 = vmatprep.subr.mxu0 0.0
    %763 = vmatpush1.msra.mxu0 0.0
    %764 = vmatprep.subr.mxu0 0.0
    %765 = vmatpush1.msra.mxu0 0.0
    %766 = vmatprep.subr.mxu0 0.0
    %767 = vmatpush1.msra.mxu0 0.0
    %768 = vmatprep.subr.mxu0 0.0
    %769 = vmatpush1.msra.mxu0 0.0
    %770 = vmatprep.subr.mxu0 0.0
    %771 = vmatpush1.msra.mxu0 0.0
    %772 = vmatprep.subr.mxu0 0.0
    %773 = vmatpush1.msra.mxu0 0.0
    %774 = vmatprep.subr.mxu0 0.0
    %775 = vmatpush1.msra.mxu0 0.0
    %776 = vmatprep.subr.mxu0 0.0
    %777 = vmatpush1.msra.mxu0 0.0
    %778 = vmatprep.subr.mxu0 0.0
    %779 = vmatpush1.msra.mxu0 0.0
    %780 = vmatprep.subr.mxu0 0.0
    %781 = vmatpush1.msra.mxu0 0.0
    %782 = vmatprep.subr.mxu0 0.0
    %783 = vmatpush1.msra.mxu0 0.0
    %784 = vmatprep.subr.mxu0 0.0
    %785 = vmatpush1.msra.mxu0 0.0
    %786 = vmatprep.subr.mxu0 0.0
    %787 = vmatpush1.msra.mxu0 0.0
    %788 = vmatprep.subr.mxu0 0.0
    %789 = vmatpush1.msra.mxu0 0.0
    %790 = vmatprep.subr.mxu0 0.0
    %791 = vmatpush1.msra.mxu0 0.0
    %792 = vmatprep.subr.mxu0 0.0
    %793 = vmatpush1.msra.mxu0 0.0
    %794 = vmatprep.subr.mxu0 0.0
    %795 = vmatpush1.msra.mxu0 0.0
    %796 = vmatprep.subr.mxu0 0.0
    %797 = vmatpush1.msra.mxu0 0.0
    %798 = vmatprep.subr.mxu0 0.0
    %799 = vmatpush1.msra.mxu0 0.0
    %800 = vmatprep.mubr.f32.mxu0 0.0
    %v801 = vand.u32 %v572, 4294901760
    %v802 = vsub.f32 %v572, %v801
    %803 = vmatmul.mubr.f32.gmra.mrb[0].mxu0 %v802
    %v804 = vpop.f32.mrb[0].mxu0
    %v805 = vadd.f32 %v729, %v804
    %v806 = vpop.f32.mrb[0].mxu0
    %807 = vdwg.mxu0
    %808 = vmatprep.subr.mxu0 0.0
    %v809 = vand.u32 %v19, 4294901760
    %810 = vmatpush1.msra.mxu0 %v809
    %811 = vmatprep.subr.mxu0 0.0
    %v812 = vand.u32 %v20, 4294901760
    %813 = vmatpush1.msra.mxu0 %v812
    %814 = vmatprep.subr.mxu0 0.0
    %815 = vmatpush1.msra.mxu0 0.0
    %816 = vmatprep.subr.mxu0 0.0
    %817 = vmatpush1.msra.mxu0 0.0
    %818 = vmatprep.subr.mxu0 0.0
    %819 = vmatpush1.msra.mxu0 0.0
    %820 = vmatprep.subr.mxu0 0.0
    %821 = vmatpush1.msra.mxu0 0.0
    %822 = vmatprep.subr.mxu0 0.0
    %823 = vmatpush1.msra.mxu0 0.0
    %824 = vmatprep.subr.mxu0 0.0
    %825 = vmatpush1.msra.mxu0 0.0
    %826 = vmatprep.subr.mxu0 0.0
    %827 = vmatpush1.msra.mxu0 0.0
    %828 = vmatprep.subr.mxu0 0.0
    %829 = vmatpush1.msra.mxu0 0.0
    %830 = vmatprep.subr.mxu0 0.0
    %831 = vmatpush1.msra.mxu0 0.0
    %832 = vmatprep.subr.mxu0 0.0
    %833 = vmatpush1.msra.mxu0 0.0
    %834 = vmatprep.subr.mxu0 0.0
    %835 = vmatpush1.msra.mxu0 0.0
    %836 = vmatprep.subr.mxu0 0.0
    %837 = vmatpush1.msra.mxu0 0.0
    %838 = vmatprep.subr.mxu0 0.0
    %839 = vmatpush1.msra.mxu0 0.0
    %840 = vmatprep.subr.mxu0 0.0
    %841 = vmatpush1.msra.mxu0 0.0
    %842 = vmatprep.subr.mxu0 0.0
    %843 = vmatpush1.msra.mxu0 0.0
    %844 = vmatprep.subr.mxu0 0.0
    %845 = vmatpush1.msra.mxu0 0.0
    %846 = vmatprep.subr.mxu0 0.0
    %847 = vmatpush1.msra.mxu0 0.0
    %848 = vmatprep.subr.mxu0 0.0
    %849 = vmatpush1.msra.mxu0 0.0
    %850 = vmatprep.subr.mxu0 0.0
    %851 = vmatpush1.msra.mxu0 0.0
    %852 = vmatprep.subr.mxu0 0.0
    %853 = vmatpush1.msra.mxu0 0.0
    %854 = vmatprep.subr.mxu0 0.0
    %855 = vmatpush1.msra.mxu0 0.0
    %856 = vmatprep.subr.mxu0 0.0
    %857 = vmatpush1.msra.mxu0 0.0
    %858 = vmatprep.subr.mxu0 0.0
    %859 = vmatpush1.msra.mxu0 0.0
    %860 = vmatprep.subr.mxu0 0.0
    %861 = vmatpush1.msra.mxu0 0.0
    %862 = vmatprep.subr.mxu0 0.0
    %863 = vmatpush1.msra.mxu0 0.0
    %864 = vmatprep.subr.mxu0 0.0
    %865 = vmatpush1.msra.mxu0 0.0
    %866 = vmatprep.subr.mxu0 0.0
    %867 = vmatpush1.msra.mxu0 0.0
    %868 = vmatprep.subr.mxu0 0.0
    %869 = vmatpush1.msra.mxu0 0.0
    %870 = vmatprep.subr.mxu0 0.0
    %871 = vmatpush1.msra.mxu0 0.0
    %872 = vmatprep.subr.mxu0 0.0
    %873 = vmatpush1.msra.mxu0 0.0
    %874 = vmatprep.mubr.f32.mxu0 0.0
    %v875 = vand.u32 %v572, 4294901760
    %v876 = vsub.f32 %v572, %v875
    %v877 = vand.u32 %v876, 4294901760
    %878 = vmatmul.mubr.f32.gmra.mrb[0].mxu0 %v877
    %v879 = vpop.f32.mrb[0].mxu0
    %v880 = vadd.f32 %v805, %v879
    %v881 = vpop.f32.mrb[0].mxu0
    %882 = vdwg.mxu0
    %883 = vmatprep.subr.mxu0 0.0
    %v884 = vand.u32 %v19, 4294901760
    %v885 = vsub.f32 %v19, %v884
    %v886 = vand.u32 %v885, 4294901760
    %887 = vmatpush1.msra.mxu0 %v886
    %888 = vmatprep.subr.mxu0 0.0
    %v889 = vand.u32 %v20, 4294901760
    %v890 = vsub.f32 %v20, %v889
    %v891 = vand.u32 %v890, 4294901760
    %892 = vmatpush1.msra.mxu0 %v891
    %893 = vmatprep.subr.mxu0 0.0
    %894 = vmatpush1.msra.mxu0 0.0
    %895 = vmatprep.subr.mxu0 0.0
    %896 = vmatpush1.msra.mxu0 0.0
    %897 = vmatprep.subr.mxu0 0.0
    %898 = vmatpush1.msra.mxu0 0.0
    %899 = vmatprep.subr.mxu0 0.0
    %900 = vmatpush1.msra.mxu0 0.0
    %901 = vmatprep.subr.mxu0 0.0
    %902 = vmatpush1.msra.mxu0 0.0
    %903 = vmatprep.subr.mxu0 0.0
    %904 = vmatpush1.msra.mxu0 0.0
    %905 = vmatprep.subr.mxu0 0.0
    %906 = vmatpush1.msra.mxu0 0.0
    %907 = vmatprep.subr.mxu0 0.0
    %908 = vmatpush1.msra.mxu0 0.0
    %909 = vmatprep.subr.mxu0 0.0
    %910 = vmatpush1.msra.mxu0 0.0
    %911 = vmatprep.subr.mxu0 0.0
    %912 = vmatpush1.msra.mxu0 0.0
    %913 = vmatprep.subr.mxu0 0.0
    %914 = vmatpush1.msra.mxu0 0.0
    %915 = vmatprep.subr.mxu0 0.0
    %916 = vmatpush1.msra.mxu0 0.0
    %917 = vmatprep.subr.mxu0 0.0
    %918 = vmatpush1.msra.mxu0 0.0
    %919 = vmatprep.subr.mxu0 0.0
    %920 = vmatpush1.msra.mxu0 0.0
    %921 = vmatprep.subr.mxu0 0.0
    %922 = vmatpush1.msra.mxu0 0.0
    %923 = vmatprep.subr.mxu0 0.0
    %924 = vmatpush1.msra.mxu0 0.0
    %925 = vmatprep.subr.mxu0 0.0
    %926 = vmatpush1.msra.mxu0 0.0
    %927 = vmatprep.subr.mxu0 0.0
    %928 = vmatpush1.msra.mxu0 0.0
    %929 = vmatprep.subr.mxu0 0.0
    %930 = vmatpush1.msra.mxu0 0.0
    %931 = vmatprep.subr.mxu0 0.0
    %932 = vmatpush1.msra.mxu0 0.0
    %933 = vmatprep.subr.mxu0 0.0
    %934 = vmatpush1.msra.mxu0 0.0
    %935 = vmatprep.subr.mxu0 0.0
    %936 = vmatpush1.msra.mxu0 0.0
    %937 = vmatprep.subr.mxu0 0.0
    %938 = vmatpush1.msra.mxu0 0.0
    %939 = vmatprep.subr.mxu0 0.0
    %940 = vmatpush1.msra.mxu0 0.0
    %941 = vmatprep.subr.mxu0 0.0
    %942 = vmatpush1.msra.mxu0 0.0
    %943 = vmatprep.subr.mxu0 0.0
    %944 = vmatpush1.msra.mxu0 0.0
    %945 = vmatprep.subr.mxu0 0.0
    %946 = vmatpush1.msra.mxu0 0.0
    %947 = vmatprep.subr.mxu0 0.0
    %948 = vmatpush1.msra.mxu0 0.0
    %949 = vmatprep.subr.mxu0 0.0
    %950 = vmatpush1.msra.mxu0 0.0
    %951 = vmatprep.subr.mxu0 0.0
    %952 = vmatpush1.msra.mxu0 0.0
    %953 = vmatprep.mubr.f32.mxu0 0.0
    %v954 = vand.u32 %v572, 4294901760
    %955 = vmatmul.mubr.f32.gmra.mrb[0].mxu0 %v954
    %v956 = vpop.f32.mrb[0].mxu0
    %v957 = vadd.f32 %v880, %v956
    %v958 = vpop.f32.mrb[0].mxu0
    %959 = vdwg.mxu0
    %960 = vmatprep.subr.mxu0 0.0
    %v961 = vand.u32 %v19, 4294901760
    %962 = vmatpush1.msra.mxu0 %v961
    %963 = vmatprep.subr.mxu0 0.0
    %v964 = vand.u32 %v20, 4294901760
    %965 = vmatpush1.msra.mxu0 %v964
    %966 = vmatprep.subr.mxu0 0.0
    %967 = vmatpush1.msra.mxu0 0.0
    %968 = vmatprep.subr.mxu0 0.0
    %969 = vmatpush1.msra.mxu0 0.0
    %970 = vmatprep.subr.mxu0 0.0
    %971 = vmatpush1.msra.mxu0 0.0
    %972 = vmatprep.subr.mxu0 0.0
    %973 = vmatpush1.msra.mxu0 0.0
    %974 = vmatprep.subr.mxu0 0.0
    %975 = vmatpush1.msra.mxu0 0.0
    %976 = vmatprep.subr.mxu0 0.0
    %977 = vmatpush1.msra.mxu0 0.0
    %978 = vmatprep.subr.mxu0 0.0
    %979 = vmatpush1.msra.mxu0 0.0
    %980 = vmatprep.subr.mxu0 0.0
    %981 = vmatpush1.msra.mxu0 0.0
    %982 = vmatprep.subr.mxu0 0.0
    %983 = vmatpush1.msra.mxu0 0.0
    %984 = vmatprep.subr.mxu0 0.0
    %985 = vmatpush1.msra.mxu0 0.0
    %986 = vmatprep.subr.mxu0 0.0
    %987 = vmatpush1.msra.mxu0 0.0
    %988 = vmatprep.subr.mxu0 0.0
    %989 = vmatpush1.msra.mxu0 0.0
    %990 = vmatprep.subr.mxu0 0.0
    %991 = vmatpush1.msra.mxu0 0.0
    %992 = vmatprep.subr.mxu0 0.0
    %993 = vmatpush1.msra.mxu0 0.0
    %994 = vmatprep.subr.mxu0 0.0
    %995 = vmatpush1.msra.mxu0 0.0
    %996 = vmatprep.subr.mxu0 0.0
    %997 = vmatpush1.msra.mxu0 0.0
    %998 = vmatprep.subr.mxu0 0.0
    %999 = vmatpush1.msra.mxu0 0.0
    %1000 = vmatprep.subr.mxu0 0.0
    %1001 = vmatpush1.msra.mxu0 0.0
    %1002 = vmatprep.subr.mxu0 0.0
    %1003 = vmatpush1.msra.mxu0 0.0
    %1004 = vmatprep.subr.mxu0 0.0
    %1005 = vmatpush1.msra.mxu0 0.0
    %1006 = vmatprep.subr.mxu0 0.0
    %1007 = vmatpush1.msra.mxu0 0.0
    %1008 = vmatprep.subr.mxu0 0.0
    %1009 = vmatpush1.msra.mxu0 0.0
    %1010 = vmatprep.subr.mxu0 0.0
    %1011 = vmatpush1.msra.mxu0 0.0
    %1012 = vmatprep.subr.mxu0 0.0
    %1013 = vmatpush1.msra.mxu0 0.0
    %1014 = vmatprep.subr.mxu0 0.0
    %1015 = vmatpush1.msra.mxu0 0.0
    %1016 = vmatprep.subr.mxu0 0.0
    %1017 = vmatpush1.msra.mxu0 0.0
    %1018 = vmatprep.subr.mxu0 0.0
    %1019 = vmatpush1.msra.mxu0 0.0
    %1020 = vmatprep.subr.mxu0 0.0
    %1021 = vmatpush1.msra.mxu0 0.0
    %1022 = vmatprep.subr.mxu0 0.0
    %1023 = vmatpush1.msra.mxu0 0.0
    %1024 = vmatprep.subr.mxu0 0.0
    %1025 = vmatpush1.msra.mxu0 0.0
    %1026 = vmatprep.mubr.f32.mxu0 0.0
    %v1027 = vand.u32 %v572, 4294901760
    %1028 = vmatmul.mubr.f32.gmra.mrb[0].mxu0 %v1027
    %v1029 = vpop.f32.mrb[0].mxu0
    %v1030 = vadd.f32 %v957, %v1029
    %v1031 = vpop.f32.mrb[0].mxu0
    %1032 = vdwg.mxu0
    %v1033 = vadd.f32 %v18, %v1030
    %1034 = vst.msk [vmem:[#allocation4] sm:$0xff] %vm29, %v1033
    %v1035 = vld [vmem:[%s2 + $0x1] sm:$0x1]
    %v1036 = vld [vmem:[%s2 + $0x8] sm:$0xff]
    %v1037 = vlaneseq
    %v1038 = vshrl.u32 %v1037, 7
    %v1039 = vsub.s32 0, %v1038
    %v1040 = vrot.slane %v1035, %v1039
    %1042 = vset.pattern.permute.xlu0 0
    %1043 = vperm.xlu0 %1042, %v1036
    %v1044 = vpop.permute.xlu0 %1043
    %v1046 = vsub.f32 %v1040, %v1044
    %v1047 = vand.u32 2147483647, %v1046
    %v1048 = vmul.f32 %v1047, %v570
    %v1049 = vsel %vm527, %v1048, 0.0
    %1050 = vadd.xlane.f32.xlu0 %v1049
    %v1051 = vpop.xlane.xlu0 %1050
    %v1052 = vrot.slane %v1051, 4
    %v1053 = vadd.f32 %v1051, %v1052
    %v1054 = vrot.slane %v1053, 2
    %v1055 = vadd.f32 %v1053, %v1054
    %v1056 = vrot.slane %v1055, 1
    %v1057 = vadd.f32 %v1055, %v1056
    %s1058 = vtos %v1057
    %s1059 = smul.f32 %s1058, 0.125
    %s1060 = sadd.f32 %s1059, 0.0001
    %s1061 = scalar_lea.smem [#allocation7], 0
    %1062 = sst [smem:[%s1061]] %s1060
    // Predicated region
    $region14: #{gcn_forward.1} parent=1 // pred_check
      _
    $region15: #{gcn_forward.1} parent=1 // pred_check_branch
      %1064 = sbr.rel (0) target = $region17
    $region16: #{gcn_forward.1} parent=1 // pred_region
      %s1066 = ssub.s32 128, 128
      %1067 = vsyncadd [#allocation5], %s1066
      %s1069 = sshll.u32 [#allocation4], 4
      %s1070 = int_to_ptr.vmem [resolvable:$true] %s1069
      %1072 = dma.vmem_to_hbm [thread:$0]  %s1070, 128, %s3, [#allocation5]
    $region17: #{gcn_forward.1} parent=1 // pred_fallthru
      _
    // Predicated region
    $region18: #{gcn_forward.1} parent=1 // pred_check
      _
    $region19: #{gcn_forward.1} parent=1 // pred_check_branch
      %1074 = sbr.rel (0) target = $region21
    $region20: #{gcn_forward.1} parent=1 // pred_region
      %s1076 = ssub.s32 16, 16
      %1077 = vsyncadd [#allocation6], %s1076
      %1080 = dma.smem_to_hbm [#allocation7], 16, %s4, [#allocation6]
    $region21: #{gcn_forward.1} parent=1 // pred_fallthru
      _
    // Predicated region
    $region22: #{gcn_forward.1} parent=1 // pred_check
      _
    $region23: #{gcn_forward.1} parent=1 // pred_check_branch
      %1082 = sbr.rel (0) target = $region25
    $region24: #{gcn_forward.1} parent=1 // pred_region
      %1083 = dma.done [#allocation5], 128
    $region25: #{gcn_forward.1} parent=1 // pred_fallthru
      _
    // Predicated region
    $region26: #{gcn_forward.1} parent=1 // pred_check
      _
    $region27: #{gcn_forward.1} parent=1 // pred_check_branch
      %1085 = sbr.rel (0) target = $region29
    $region28: #{gcn_forward.1} parent=1 // pred_region
      %1086 = dma.done [#allocation6], 16
    $region29: #{gcn_forward.1} parent=1 // pred_fallthru
      _
    %1087 = sfence
    %1088 = vsyncpa [#allocation5], 1
    %1089 = vsyncpa [#allocation6], 1

</llo_original>
